<compile_context>
chip_gen: v6e
topology: v6e:2x2x1
jax: 0.10.0
libtpu: 0.0.40
codegen_flags: <defaults>
</compile_context>

<pallas_src>
import numpy as np
import jax
import jax.numpy as jnp
from jax.experimental import pallas as pl
from jax.experimental.pallas import tpu as pltpu


def _copy_kernel(x_ref, o_ref):
    # Pure lane-dense copy of the current (TR, TC) VMEM tile.
    # (Fusion point: any elementwise compute would go here.)
    o_ref[...] = x_ref[...]


def _pick_slab_tiles(total, itemsize, max_block_bytes=2 * 1024 * 1024):
    """Pick (rows, TC, TR) for a dense slab view of `total` elements.

    TC: largest multiple of 128 (<= 4096) dividing `total` (bounded search).
    TR: multiple of 8 rows, capped by the block-byte budget; ragged last
        block handled via a cdiv grid.  Returns None if no lane-dense slab
        exists (total not a multiple of 128).
    """
    if total % 128 != 0:
        return None
    tc = 0
    c = min(4096, total)
    c -= c % 128
    while c >= 128:                       # bounded: at most 32 candidates
        if total % c == 0:
            tc = c
            break
        c -= 128
    if tc == 0:
        return None
    rows = total // tc
    if rows < 8:
        tr = rows                          # full extent (valid block shape)
    else:
        budget_rows = max(8, (max_block_bytes // (tc * itemsize)) // 8 * 8)
        tr = max(8, min(budget_rows, (rows // 8) * 8))
    return rows, tc, tr


def flatten(x, keep_batch_dim=True, use_pallas=False):
    """Pallas equivalent of Flatten.forward.

    keep_batch_dim=True  -> (N, prod(rest))
    keep_batch_dim=False -> (prod(all),)

    Default (use_pallas=False): free metadata reshape, zero HBM traffic.
    use_pallas=True: routes the data through a lane-dense tiled copy kernel
    (only useful as a fusion point for real compute).
    """
    n = x.shape[0]
    flat = int(np.prod(x.shape[1:]))
    total = n * flat
    itemsize = jnp.dtype(x.dtype).itemsize

    # Free, contiguous row-major collapse (same semantics as torch .view).
    x2d = jnp.reshape(x, (n, flat))

    tiles = _pick_slab_tiles(total, itemsize) if use_pallas else None
    if tiles is None:
        # Recommended path for a *pure* flatten — and the fallback when the
        # element count cannot form a lane-dense slab without padding.
        return x2d if keep_batch_dim else jnp.reshape(x2d, (-1,))

    rows, tc, tr = tiles
    slab = jnp.reshape(x2d, (rows, tc))    # free metadata reshape

    out_slab = pl.pallas_call(
        _copy_kernel,
        out_shape=jax.ShapeDtypeStruct((rows, tc), x.dtype),
        grid=(pl.cdiv(rows, tr),),
        in_specs=[pl.BlockSpec((tr, tc), lambda i: (i, 0))],
        out_specs=pl.BlockSpec((tr, tc), lambda i: (i, 0)),
        compiler_params=pltpu.CompilerParams(
            dimension_semantics=("parallel",),
        ),
        cost_estimate=pl.CostEstimate(
            flops=0, transcendentals=0, bytes_accessed=2 * total * itemsize),
    )(slab)

    if keep_batch_dim:
        return jnp.reshape(out_slab, (n, flat))
    return jnp.reshape(out_slab, (-1,))


if __name__ == "__main__":
    key = jax.random.PRNGKey(0)
    # NCHW: batch=2, channels=4, spatial=16x16  -> flat dim 1024, total 2048.
    x = jax.random.normal(key, (2, 4, 16, 16), dtype=jnp.float32)
    ref = x.reshape(x.shape[0], -1)
    ref_flat = x.reshape(-1)

    # Default (recommended) path: pure metadata reshape, no kernel.
    y_def = flatten(x, keep_batch_dim=True)
    jax.block_until_ready(y_def)
    assert y_def.shape == (2, 4 * 16 * 16), y_def.shape
    assert jnp.array_equal(y_def, ref), "default (no-kernel) path mismatch"

    # Kernel path, keep_batch_dim=True (module default).
    y = flatten(x, keep_batch_dim=True, use_pallas=True)
    jax.block_until_ready(y)
    assert y.shape == (2, 4 * 16 * 16), y.shape
    assert jnp.array_equal(y, ref), "keep_batch_dim=True mismatch"

    # Kernel path, keep_batch_dim=False.
    y_flat = flatten(x, keep_batch_dim=False, use_pallas=True)
    jax.block_until_ready(y_flat)
    assert y_flat.shape == (2 * 4 * 16 * 16,), y_flat.shape
    assert jnp.array_equal(y_flat, ref_flat), "keep_batch_dim=False mismatch"

    print("KERNEL_OK")
</pallas_src>

<mosaic_0001>
module attributes {stable_mosaic.version = 11 : i64} {
  func.func @_copy_kernel(%arg0: i32, %arg1: memref<1x2048xf32, #tpu.memory_space<vmem>>, %arg2: memref<1x2048xf32, #tpu.memory_space<vmem>>) attributes {dimension_semantics = [#tpu.dimension_semantics<parallel>], iteration_bounds = array<i64: 1>, scalar_prefetch = 0 : i64, scratch_operands = 0 : i64, tpu.core_type = #tpu.core_type<tc>, window_params = [{transform_indices = @transform_0, window_bounds = array<i64: 1, 2048>}, {transform_indices = @transform_1, window_bounds = array<i64: 1, 2048>}]} {
    %c0 = arith.constant 0 : index
    %c0_0 = arith.constant 0 : index
    %0 = vector.load %arg1[%c0, %c0_0] : memref<1x2048xf32, #tpu.memory_space<vmem>>, vector<1x2048xf32>
    %c0_1 = arith.constant 0 : index
    %c0_2 = arith.constant 0 : index
    %1 = vector.load %arg2[%c0_1, %c0_2] : memref<1x2048xf32, #tpu.memory_space<vmem>>, vector<1x2048xf32>
    tpu.vector_store %arg2[%c0_1, %c0_2], %0 {strides = array<i32>} : memref<1x2048xf32, #tpu.memory_space<vmem>>, vector<1x2048xf32>,
    return
  }
  func.func @transform_0(%arg0: i32) -> (i32, i32) {
    %c0_i32 = arith.constant 0 : i32
    %c0_i32_0 = arith.constant 0 : i32
    return %arg0, %c0_i32 : i32, i32
  }
  func.func @transform_1(%arg0: i32) -> (i32, i32) {
    %c0_i32 = arith.constant 0 : i32
    %c0_i32_0 = arith.constant 0 : i32
    return %arg0, %c0_i32 : i32, i32
  }
}

</mosaic_0001>

<llo_original>
// kernel: tpu_custom_call.1
$region0: #{tpu_custom_call.1}
  #allocation0 [shape = 'u32[]', space=smem, size = 0x4, offset = 0x4, fixed_abs, tag = 'smem constant byte address 0x4 - core index']
  #allocation1 [shape = 'u32[144,128]{1,0:T(1,128)}', space=vmem, size = 0x12000, scoped, tag = 'internal scratch']
  %s0 = inlined_call_operand.hbm [shape: f32[1,2048], index: 0, kind: input, shape index: {}]
  %s1 = inlined_call_operand.hbm [shape: f32[1,2048], index: 1, kind: output, shape index: {}]
  %s2 = sld [smem:[#allocation0]]
  $region18: #{tpu_custom_call.1} parent=0
    _
  %s4 = ssub.s32 1, %s2
  %s5 = scalar_select 0, %s4, %s2
  $region1: #{tpu_custom_call.1} parent=0
    #allocation2 [shape = 'u8[8192]{0}', space=vmem, size = 0x2000, scoped, tag = 'input window, operand 0, single buffered']
    #allocation3 [shape = 's32[1]{0}', space=sflag, size = 0x4, scoped, tag = 'scoped memory for tpu_custom_call.1']
    #allocation4 [shape = 's32[1]{0}', space=sflag, size = 0x4, scoped, tag = 'scoped memory for tpu_custom_call.1']
    #allocation5 [shape = 'u8[8192]{0}', space=vmem, size = 0x2000, scoped, tag = 'output window, operand 0, single buffered']
    %6 = vsyncpa [#allocation3], 0
    %7 = vsyncpa [#allocation4], 0
    // Predicated region
    $region2: #{tpu_custom_call.1} parent=1 // pred_check
      _
    $region3: #{tpu_custom_call.1} parent=1 // pred_check_branch
      %9 = sbr.rel (0) target = $region5
    $region4: #{tpu_custom_call.1} parent=1 // pred_region
      %s11 = ssub.s32 256, 256
      %12 = vsyncadd [#allocation3], %s11
      %s14 = sshll.u32 [#allocation2], 4
      %s15 = int_to_ptr.vmem [resolvable:$true] %s14
      %17 = dma.hbm_to_vmem [thread:$0]  %s0, 256, %s15, [#allocation3]
    $region5: #{tpu_custom_call.1} parent=1 // pred_fallthru
      _
    // Predicated region
    $region6: #{tpu_custom_call.1} parent=1 // pred_check
      _
    $region7: #{tpu_custom_call.1} parent=1 // pred_check_branch
      %19 = sbr.rel (0) target = $region9
    $region8: #{tpu_custom_call.1} parent=1 // pred_region
      %20 = dma.done [#allocation3], 256
    $region9: #{tpu_custom_call.1} parent=1 // pred_fallthru
      _
    %v21 = vld [vmem:[#allocation2] sm:$0xff]
    %v22 = vld [vmem:[#allocation2 + $0x8] sm:$0xff]
    %23 = vst [vmem:[#allocation5] sm:$0xff] %v21
    %24 = vst [vmem:[#allocation5 + $0x8] sm:$0xff] %v22
    // Predicated region
    $region10: #{tpu_custom_call.1} parent=1 // pred_check
      _
    $region11: #{tpu_custom_call.1} parent=1 // pred_check_branch
      %26 = sbr.rel (0) target = $region13
    $region12: #{tpu_custom_call.1} parent=1 // pred_region
      %s28 = ssub.s32 256, 256
      %29 = vsyncadd [#allocation4], %s28
      %s31 = sshll.u32 [#allocation5], 4
      %s32 = int_to_ptr.vmem [resolvable:$true] %s31
      %34 = dma.vmem_to_hbm [thread:$0]  %s32, 256, %s1, [#allocation4]
    $region13: #{tpu_custom_call.1} parent=1 // pred_fallthru
      _
    // Predicated region
    $region14: #{tpu_custom_call.1} parent=1 // pred_check
      _
    $region15: #{tpu_custom_call.1} parent=1 // pred_check_branch
      %36 = sbr.rel (0) target = $region17
    $region16: #{tpu_custom_call.1} parent=1 // pred_region
      %37 = dma.done [#allocation4], 256
    $region17: #{tpu_custom_call.1} parent=1 // pred_fallthru
      _
    %38 = vsyncpa [#allocation3], 1
    %39 = vsyncpa [#allocation4], 1

</llo_original>
